<compile_context>
chip_gen: v7x
topology: tpu7x:2x2x1
jax: 0.10.0
libtpu: 0.0.40
codegen_flags: <defaults>
</compile_context>

<pallas_src>
from functools import partial

import jax
import jax.numpy as jnp
from jax.experimental import pallas as pl
from jax.experimental.pallas import tpu as pltpu


def _round_up(n, m):
    return (n + m - 1) // m * m


def _choose_tiling(batch, block_m):
    """Pick (tile_rows, padded_batch) for the batch grid axis."""
    b8 = _round_up(max(batch, 8), 8)       # minimum sublane-aligned padded batch
    bm = min(block_m, b8)                  # don't tile past the batch (tiny-B case)
    if b8 < 2 * bm and b8 >= 16:
        # A single tile would leave one v7x TensorCore idle (or pad heavily);
        # split into two roughly equal, 8-aligned tiles instead.
        bm = _round_up((b8 + 1) // 2, 8)
    b_p = _round_up(b8, bm)
    return bm, b_p


# ---------------------------------------------------------------------------
# Kernel
# ---------------------------------------------------------------------------
def simplenet_kernel(x_ref, w1_ref, b1_ref, wi_ref, bi_ref, w2_ref, b2_ref, o_ref):
    tm = x_ref.shape[0]
    cdt = w1_ref.dtype  # bf16 compute dtype for MXU inputs

    def layer_chain(xg):
        # fc1 + ReLU: cast activations to bf16 right at the MXU input,
        # accumulate in f32, bias-add / ReLU in f32 (implicit (1,N) broadcast).
        h = jnp.dot(xg.astype(cdt), w1_ref[...], preferred_element_type=jnp.float32)
        h = jnp.maximum(h + b1_ref[...], 0.0)
        # 5x fc_inner + ReLU — same weights each iteration, as in the PyTorch module.
        for _ in range(5):
            h = jnp.dot(h.astype(cdt), wi_ref[...], preferred_element_type=jnp.float32)
            h = jnp.maximum(h + bi_ref[...], 0.0)
        # fc2 (no activation), lane-dense 128-padded output.
        return (jnp.dot(h.astype(cdt), w2_ref[...], preferred_element_type=jnp.float32)
                + b2_ref[...])

    if tm >= 16 and tm % 16 == 0:
        # Two independent row-groups: their strictly-dependent matmul chains can be
        # interleaved by the scheduler, hiding the VPU epilogue / MRF drain.
        half = tm // 2
        o_ref[pl.ds(0, half), :] = layer_chain(x_ref[pl.ds(0, half), :]).astype(o_ref.dtype)
        o_ref[pl.ds(half, half), :] = layer_chain(x_ref[pl.ds(half, half), :]).astype(o_ref.dtype)
    else:
        o_ref[...] = layer_chain(x_ref[...]).astype(o_ref.dtype)


# ---------------------------------------------------------------------------
# Parameter prep: done ONCE (transpose / pad / cast), not per forward call.
# ---------------------------------------------------------------------------
def prepare_params(params, compute_dtype=jnp.bfloat16):
    """PyTorch-convention params -> pre-transposed, 128-padded, bf16 weights."""
    w1 = params["fc1_w"]        # (hidden, in_dim)
    wi = params["fc_inner_w"]   # (hidden, hidden)
    w2 = params["fc2_w"]        # (out_dim, hidden)
    hidden, in_dim = w1.shape
    out_dim = w2.shape[0]

    in_p = _round_up(in_dim, 128)
    hid_p = _round_up(hidden, 128)
    out_p = _round_up(out_dim, 128)

    def pad2(a, rows, cols):
        return jnp.pad(a, ((0, rows - a.shape[0]), (0, cols - a.shape[1])))

    w1_t = pad2(w1.T, in_p, hid_p).astype(compute_dtype)    # (in_p,  hid_p)
    wi_t = pad2(wi.T, hid_p, hid_p).astype(compute_dtype)   # (hid_p, hid_p)
    w2_t = pad2(w2.T, hid_p, out_p).astype(compute_dtype)   # (hid_p, out_p)
    # Biases stay f32 (elementwise epilogue runs in f32 on all chip generations).
    b1 = jnp.pad(params["fc1_b"], (0, hid_p - hidden)).reshape(1, -1).astype(jnp.float32)
    bi = jnp.pad(params["fc_inner_b"], (0, hid_p - hidden)).reshape(1, -1).astype(jnp.float32)
    b2 = jnp.pad(params["fc2_b"], (0, out_p - out_dim)).reshape(1, -1).astype(jnp.float32)

    return dict(w1_t=w1_t, b1=b1, wi_t=wi_t, bi=bi, w2_t=w2_t, b2=b2)


# ---------------------------------------------------------------------------
# Forward
# ---------------------------------------------------------------------------
@partial(jax.jit, static_argnames=("out_dim", "block_m"))
def simplenet_forward(x_nchw, w1_t, b1, wi_t, bi, w2_t, b2, *, out_dim, block_m=512):
    """x_nchw: (B, C, H, W) float32; weights from prepare_params()."""
    B = x_nchw.shape[0]
    x = x_nchw.reshape(B, -1).astype(jnp.float32)   # x.view(B, -1)
    in_dim = x.shape[1]

    in_p, hid_p = w1_t.shape
    out_p = w2_t.shape[1]

    bm, b_p = _choose_tiling(B, block_m)
    # Pad only when needed (zero rows / zero cols -> exact; ReLU(0)=0 and padded
    # weight rows/cols are zero). No wrapper-side bf16 copy: cast happens in-kernel.
    if b_p != B or in_p != in_dim:
        x = jnp.pad(x, ((0, b_p - B), (0, in_p - in_dim)))

    grid = (b_p // bm,)
    out = pl.pallas_call(
        simplenet_kernel,
        out_shape=jax.ShapeDtypeStruct((b_p, out_p), jnp.float32),
        grid_spec=pltpu.PrefetchScalarGridSpec(
            num_scalar_prefetch=0,
            grid=grid,
            in_specs=[
                # activation tile (f32): streams over the batch grid axis
                pl.BlockSpec((bm, in_p), lambda i: (i, 0)),
                # weights / biases: constant index_map -> VMEM-resident across steps
                pl.BlockSpec((in_p, hid_p), lambda i: (0, 0)),
                pl.BlockSpec((1, hid_p), lambda i: (0, 0)),
                pl.BlockSpec((hid_p, hid_p), lambda i: (0, 0)),
                pl.BlockSpec((1, hid_p), lambda i: (0, 0)),
                pl.BlockSpec((hid_p, out_p), lambda i: (0, 0)),
                pl.BlockSpec((1, out_p), lambda i: (0, 0)),
            ],
            out_specs=pl.BlockSpec((bm, out_p), lambda i: (i, 0)),
        ),
        compiler_params=pltpu.CompilerParams(
            dimension_semantics=("parallel",),   # batch axis: megacore-shardable
        ),
    )(x, w1_t, b1, wi_t, bi, w2_t, b2)

    return out[:B, :out_dim]


# ---------------------------------------------------------------------------
# Init + pure-JAX reference (mirrors the PyTorch module, f32 end to end)
# ---------------------------------------------------------------------------
def init_params(key, in_dim, hidden, out_dim):
    ks = jax.random.split(key, 6)

    def lin(kw, kb, fan_in, fan_out):
        bound = 1.0 / jnp.sqrt(fan_in)
        w = jax.random.uniform(kw, (fan_out, fan_in), jnp.float32, -bound, bound)
        b = jax.random.uniform(kb, (fan_out,), jnp.float32, -bound, bound)
        return w, b

    fc1_w, fc1_b = lin(ks[0], ks[1], in_dim, hidden)
    fci_w, fci_b = lin(ks[2], ks[3], hidden, hidden)
    fc2_w, fc2_b = lin(ks[4], ks[5], hidden, out_dim)
    return dict(fc1_w=fc1_w, fc1_b=fc1_b,
                fc_inner_w=fci_w, fc_inner_b=fci_b,
                fc2_w=fc2_w, fc2_b=fc2_b)


def reference_forward(x_nchw, params):
    x = x_nchw.reshape(x_nchw.shape[0], -1)
    x = jnp.maximum(x @ params["fc1_w"].T + params["fc1_b"], 0.0)
    for _ in range(5):
        x = jnp.maximum(x @ params["fc_inner_w"].T + params["fc_inner_b"], 0.0)
    return x @ params["fc2_w"].T + params["fc2_b"]


if __name__ == "__main__":
    # Small shapes consistent with the module: NCHW image input, flattened MLP.
    B, C, H, W = 2, 3, 16, 16          # in_dim = 3*16*16 = 768 (128-aligned)
    in_dim = C * H * W
    hidden = 256
    out_dim = 10

    key = jax.random.PRNGKey(0)
    k_x, k_p = jax.random.split(key)
    x = jax.random.normal(k_x, (B, C, H, W), jnp.float32)
    params = init_params(k_p, in_dim, hidden, out_dim)

    prep = prepare_params(params)                 # one-time transpose/pad/cast
    out = simplenet_forward(x, prep["w1_t"], prep["b1"], prep["wi_t"], prep["bi"],
                            prep["w2_t"], prep["b2"], out_dim=out_dim)
    out = jax.block_until_ready(out)

    ref = reference_forward(x, params)            # f32 reference
    assert out.shape == (B, out_dim)
    # bf16 MXU inputs with f32 accumulation -> loosened tolerance vs f32 reference.
    assert jnp.allclose(out, ref, atol=5e-2, rtol=5e-2), "mismatch vs reference"

    # Also exercise a larger batch (multi-step grid + in-kernel row-group split).
    B2 = 96
    x2 = jax.random.normal(jax.random.PRNGKey(1), (B2, C, H, W), jnp.float32)
    out2 = jax.block_until_ready(
        simplenet_forward(x2, prep["w1_t"], prep["b1"], prep["wi_t"], prep["bi"],
                          prep["w2_t"], prep["b2"], out_dim=out_dim))
    ref2 = reference_forward(x2, params)
    assert out2.shape == (B2, out_dim)
    assert jnp.allclose(out2, ref2, atol=5e-2, rtol=5e-2), "mismatch vs reference (B=96)"

    print("KERNEL_OK")
</pallas_src>

<mosaic_0001>
module attributes {stable_mosaic.version = 11 : i64} {
  func.func @simplenet_kernel(%arg0: i32, %arg1: memref<8x768xf32, #tpu.memory_space<vmem>>, %arg2: memref<768x256xbf16, #tpu.memory_space<vmem>>, %arg3: memref<1x256xf32, #tpu.memory_space<vmem>>, %arg4: memref<256x256xbf16, #tpu.memory_space<vmem>>, %arg5: memref<1x256xf32, #tpu.memory_space<vmem>>, %arg6: memref<256x128xbf16, #tpu.memory_space<vmem>>, %arg7: memref<1x128xf32, #tpu.memory_space<vmem>>, %arg8: memref<8x128xf32, #tpu.memory_space<vmem>>) attributes {dimension_semantics = [#tpu.dimension_semantics<parallel>], iteration_bounds = array<i64: 1>, scalar_prefetch = 0 : i64, scratch_operands = 0 : i64, tpu.core_type = #tpu.core_type<tc>, window_params = [{transform_indices = @transform_0, window_bounds = array<i64: 8, 768>}, {pipeline_mode = #tpu.pipeline_mode<synchronous>, transform_indices = @transform_1, window_bounds = array<i64: 768, 256>}, {pipeline_mode = #tpu.pipeline_mode<synchronous>, transform_indices = @transform_2, window_bounds = array<i64: 1, 256>}, {pipeline_mode = #tpu.pipeline_mode<synchronous>, transform_indices = @transform_3, window_bounds = array<i64: 256, 256>}, {pipeline_mode = #tpu.pipeline_mode<synchronous>, transform_indices = @transform_4, window_bounds = array<i64: 1, 256>}, {pipeline_mode = #tpu.pipeline_mode<synchronous>, transform_indices = @transform_5, window_bounds = array<i64: 256, 128>}, {pipeline_mode = #tpu.pipeline_mode<synchronous>, transform_indices = @transform_6, window_bounds = array<i64: 1, 128>}, {transform_indices = @transform_7, window_bounds = array<i64: 8, 128>}]} {
    %c0 = arith.constant 0 : index
    %c0_0 = arith.constant 0 : index
    %0 = vector.load %arg1[%c0, %c0_0] : memref<8x768xf32, #tpu.memory_space<vmem>>, vector<8x768xf32>
    %1 = arith.truncf %0 : vector<8x768xf32> to vector<8x768xbf16>
    %c0_1 = arith.constant 0 : index
    %c0_2 = arith.constant 0 : index
    %2 = vector.load %arg2[%c0_1, %c0_2] : memref<768x256xbf16, #tpu.memory_space<vmem>>, vector<768x256xbf16>
    %cst = arith.constant dense<0.000000e+00> : vector<8x256xf32>
    %3 = tpu.matmul %1, %2, %cst {dimension_numbers = #tpu.dot_dimension_numbers<[1], [0], [0], [1], [0, 0, 1, 1], [], []>} : vector<8x768xbf16>, vector<768x256xbf16>, vector<8x256xf32> -> vector<8x256xf32>
    %c0_3 = arith.constant 0 : index
    %c0_4 = arith.constant 0 : index
    %4 = vector.load %arg3[%c0_3, %c0_4] : memref<1x256xf32, #tpu.memory_space<vmem>>, vector<1x256xf32>
    %5 = vector.broadcast %4 : vector<1x256xf32> to vector<8x256xf32>
    %6 = arith.addf %3, %5 : vector<8x256xf32>
    %cst_5 = arith.constant 0.000000e+00 : f32
    %7 = vector.broadcast %cst_5 : f32 to vector<8x256xf32>
    %8 = arith.maximumf %6, %7 : vector<8x256xf32>
    %9 = arith.truncf %8 : vector<8x256xf32> to vector<8x256xbf16>
    %c0_6 = arith.constant 0 : index
    %c0_7 = arith.constant 0 : index
    %10 = vector.load %arg4[%c0_6, %c0_7] : memref<256x256xbf16, #tpu.memory_space<vmem>>, vector<256x256xbf16>
    %cst_8 = arith.constant dense<0.000000e+00> : vector<8x256xf32>
    %11 = tpu.matmul %9, %10, %cst_8 {dimension_numbers = #tpu.dot_dimension_numbers<[1], [0], [0], [1], [0, 0, 1, 1], [], []>} : vector<8x256xbf16>, vector<256x256xbf16>, vector<8x256xf32> -> vector<8x256xf32>
    %c0_9 = arith.constant 0 : index
    %c0_10 = arith.constant 0 : index
    %12 = vector.load %arg5[%c0_9, %c0_10] : memref<1x256xf32, #tpu.memory_space<vmem>>, vector<1x256xf32>
    %13 = vector.broadcast %12 : vector<1x256xf32> to vector<8x256xf32>
    %14 = arith.addf %11, %13 : vector<8x256xf32>
    %cst_11 = arith.constant 0.000000e+00 : f32
    %15 = vector.broadcast %cst_11 : f32 to vector<8x256xf32>
    %16 = arith.maximumf %14, %15 : vector<8x256xf32>
    %17 = arith.truncf %16 : vector<8x256xf32> to vector<8x256xbf16>
    %c0_12 = arith.constant 0 : index
    %c0_13 = arith.constant 0 : index
    %18 = vector.load %arg4[%c0_12, %c0_13] : memref<256x256xbf16, #tpu.memory_space<vmem>>, vector<256x256xbf16>
    %cst_14 = arith.constant dense<0.000000e+00> : vector<8x256xf32>
    %19 = tpu.matmul %17, %18, %cst_14 {dimension_numbers = #tpu.dot_dimension_numbers<[1], [0], [0], [1], [0, 0, 1, 1], [], []>} : vector<8x256xbf16>, vector<256x256xbf16>, vector<8x256xf32> -> vector<8x256xf32>
    %c0_15 = arith.constant 0 : index
    %c0_16 = arith.constant 0 : index
    %20 = vector.load %arg5[%c0_15, %c0_16] : memref<1x256xf32, #tpu.memory_space<vmem>>, vector<1x256xf32>
    %21 = vector.broadcast %20 : vector<1x256xf32> to vector<8x256xf32>
    %22 = arith.addf %19, %21 : vector<8x256xf32>
    %cst_17 = arith.constant 0.000000e+00 : f32
    %23 = vector.broadcast %cst_17 : f32 to vector<8x256xf32>
    %24 = arith.maximumf %22, %23 : vector<8x256xf32>
    %25 = arith.truncf %24 : vector<8x256xf32> to vector<8x256xbf16>
    %c0_18 = arith.constant 0 : index
    %c0_19 = arith.constant 0 : index
    %26 = vector.load %arg4[%c0_18, %c0_19] : memref<256x256xbf16, #tpu.memory_space<vmem>>, vector<256x256xbf16>
    %cst_20 = arith.constant dense<0.000000e+00> : vector<8x256xf32>
    %27 = tpu.matmul %25, %26, %cst_20 {dimension_numbers = #tpu.dot_dimension_numbers<[1], [0], [0], [1], [0, 0, 1, 1], [], []>} : vector<8x256xbf16>, vector<256x256xbf16>, vector<8x256xf32> -> vector<8x256xf32>
    %c0_21 = arith.constant 0 : index
    %c0_22 = arith.constant 0 : index
    %28 = vector.load %arg5[%c0_21, %c0_22] : memref<1x256xf32, #tpu.memory_space<vmem>>, vector<1x256xf32>
    %29 = vector.broadcast %28 : vector<1x256xf32> to vector<8x256xf32>
    %30 = arith.addf %27, %29 : vector<8x256xf32>
    %cst_23 = arith.constant 0.000000e+00 : f32
    %31 = vector.broadcast %cst_23 : f32 to vector<8x256xf32>
    %32 = arith.maximumf %30, %31 : vector<8x256xf32>
    %33 = arith.truncf %32 : vector<8x256xf32> to vector<8x256xbf16>
    %c0_24 = arith.constant 0 : index
    %c0_25 = arith.constant 0 : index
    %34 = vector.load %arg4[%c0_24, %c0_25] : memref<256x256xbf16, #tpu.memory_space<vmem>>, vector<256x256xbf16>
    %cst_26 = arith.constant dense<0.000000e+00> : vector<8x256xf32>
    %35 = tpu.matmul %33, %34, %cst_26 {dimension_numbers = #tpu.dot_dimension_numbers<[1], [0], [0], [1], [0, 0, 1, 1], [], []>} : vector<8x256xbf16>, vector<256x256xbf16>, vector<8x256xf32> -> vector<8x256xf32>
    %c0_27 = arith.constant 0 : index
    %c0_28 = arith.constant 0 : index
    %36 = vector.load %arg5[%c0_27, %c0_28] : memref<1x256xf32, #tpu.memory_space<vmem>>, vector<1x256xf32>
    %37 = vector.broadcast %36 : vector<1x256xf32> to vector<8x256xf32>
    %38 = arith.addf %35, %37 : vector<8x256xf32>
    %cst_29 = arith.constant 0.000000e+00 : f32
    %39 = vector.broadcast %cst_29 : f32 to vector<8x256xf32>
    %40 = arith.maximumf %38, %39 : vector<8x256xf32>
    %41 = arith.truncf %40 : vector<8x256xf32> to vector<8x256xbf16>
    %c0_30 = arith.constant 0 : index
    %c0_31 = arith.constant 0 : index
    %42 = vector.load %arg4[%c0_30, %c0_31] : memref<256x256xbf16, #tpu.memory_space<vmem>>, vector<256x256xbf16>
    %cst_32 = arith.constant dense<0.000000e+00> : vector<8x256xf32>
    %43 = tpu.matmul %41, %42, %cst_32 {dimension_numbers = #tpu.dot_dimension_numbers<[1], [0], [0], [1], [0, 0, 1, 1], [], []>} : vector<8x256xbf16>, vector<256x256xbf16>, vector<8x256xf32> -> vector<8x256xf32>
    %c0_33 = arith.constant 0 : index
    %c0_34 = arith.constant 0 : index
    %44 = vector.load %arg5[%c0_33, %c0_34] : memref<1x256xf32, #tpu.memory_space<vmem>>, vector<1x256xf32>
    %45 = vector.broadcast %44 : vector<1x256xf32> to vector<8x256xf32>
    %46 = arith.addf %43, %45 : vector<8x256xf32>
    %cst_35 = arith.constant 0.000000e+00 : f32
    %47 = vector.broadcast %cst_35 : f32 to vector<8x256xf32>
    %48 = arith.maximumf %46, %47 : vector<8x256xf32>
    %49 = arith.truncf %48 : vector<8x256xf32> to vector<8x256xbf16>
    %c0_36 = arith.constant 0 : index
    %c0_37 = arith.constant 0 : index
    %50 = vector.load %arg6[%c0_36, %c0_37] : memref<256x128xbf16, #tpu.memory_space<vmem>>, vector<256x128xbf16>
    %cst_38 = arith.constant dense<0.000000e+00> : vector<8x128xf32>
    %51 = tpu.matmul %49, %50, %cst_38 {dimension_numbers = #tpu.dot_dimension_numbers<[1], [0], [0], [1], [0, 0, 1, 1], [], []>} : vector<8x256xbf16>, vector<256x128xbf16>, vector<8x128xf32> -> vector<8x128xf32>
    %c0_39 = arith.constant 0 : index
    %c0_40 = arith.constant 0 : index
    %52 = vector.load %arg7[%c0_39, %c0_40] : memref<1x128xf32, #tpu.memory_space<vmem>>, vector<1x128xf32>
    %53 = vector.broadcast %52 : vector<1x128xf32> to vector<8x128xf32>
    %54 = arith.addf %51, %53 : vector<8x128xf32>
    %c0_41 = arith.constant 0 : index
    %c0_42 = arith.constant 0 : index
    %55 = vector.load %arg8[%c0_41, %c0_42] : memref<8x128xf32, #tpu.memory_space<vmem>>, vector<8x128xf32>
    tpu.vector_store %arg8[%c0_41, %c0_42], %54 {strides = array<i32>} : memref<8x128xf32, #tpu.memory_space<vmem>>, vector<8x128xf32>,
    return
  }
  func.func @transform_0(%arg0: i32) -> (i32, i32) {
    %c0_i32 = arith.constant 0 : i32
    %c0_i32_0 = arith.constant 0 : i32
    return %arg0, %c0_i32 : i32, i32
  }
  func.func @transform_1(%arg0: i32) -> (i32, i32) {
    %c0_i32 = arith.constant 0 : i32
    %c0_i32_0 = arith.constant 0 : i32
    %c0_i32_1 = arith.constant 0 : i32
    return %c0_i32, %c0_i32_0 : i32, i32
  }
  func.func @transform_2(%arg0: i32) -> (i32, i32) {
    %c0_i32 = arith.constant 0 : i32
    %c0_i32_0 = arith.constant 0 : i32
    %c0_i32_1 = arith.constant 0 : i32
    return %c0_i32, %c0_i32_0 : i32, i32
  }
  func.func @transform_3(%arg0: i32) -> (i32, i32) {
    %c0_i32 = arith.constant 0 : i32
    %c0_i32_0 = arith.constant 0 : i32
    %c0_i32_1 = arith.constant 0 : i32
    return %c0_i32, %c0_i32_0 : i32, i32
  }
  func.func @transform_4(%arg0: i32) -> (i32, i32) {
    %c0_i32 = arith.constant 0 : i32
    %c0_i32_0 = arith.constant 0 : i32
    %c0_i32_1 = arith.constant 0 : i32
    return %c0_i32, %c0_i32_0 : i32, i32
  }
  func.func @transform_5(%arg0: i32) -> (i32, i32) {
    %c0_i32 = arith.constant 0 : i32
    %c0_i32_0 = arith.constant 0 : i32
    %c0_i32_1 = arith.constant 0 : i32
    return %c0_i32, %c0_i32_0 : i32, i32
  }
  func.func @transform_6(%arg0: i32) -> (i32, i32) {
    %c0_i32 = arith.constant 0 : i32
    %c0_i32_0 = arith.constant 0 : i32
    %c0_i32_1 = arith.constant 0 : i32
    return %c0_i32, %c0_i32_0 : i32, i32
  }
  func.func @transform_7(%arg0: i32) -> (i32, i32) {
    %c0_i32 = arith.constant 0 : i32
    %c0_i32_0 = arith.constant 0 : i32
    return %arg0, %c0_i32 : i32, i32
  }
}

</mosaic_0001>

<llo_original>
// kernel: simplenet_forward.1
$region0: #{simplenet_forward.1}
  #allocation0 [shape = 'u32[]', space=smem, size = 0x4, offset = 0x4, fixed_abs, tag = 'smem constant byte address 0x4 - core index']
  #allocation1 [shape = 'u32[144,128]{1,0:T(1,128)}', space=vmem, size = 0x12000, scoped, tag = 'internal scratch']
  %s0 = inlined_call_operand.vmem [shape: f32[8,768], index: 0, kind: input, shape index: {}]
  %s1 = inlined_call_operand.hbm [shape: bf16[768,256], index: 1, kind: input, shape index: {}]
  %s2 = inlined_call_operand.vmem [shape: f32[1,256], index: 2, kind: input, shape index: {}]
  %s3 = inlined_call_operand.hbm [shape: bf16[256,256], index: 3, kind: input, shape index: {}]
  %s4 = inlined_call_operand.vmem [shape: f32[1,256], index: 4, kind: input, shape index: {}]
  %s5 = inlined_call_operand.vmem [shape: bf16[256,128], index: 5, kind: input, shape index: {}]
  %s6 = inlined_call_operand.vmem [shape: f32[1,128], index: 6, kind: input, shape index: {}]
  %s7 = inlined_call_operand.vmem [shape: f32[8,128], index: 7, kind: output, shape index: {}]
  %s8 = sld [smem:[#allocation0]]
  $region46: #{simplenet_forward.1} parent=0
    _
  %s10 = ssub.s32 1, %s8
  %s11 = scalar_select 0, %s10, %s8
  $region1: #{simplenet_forward.1} parent=0
    #allocation2 [shape = 'u8[393216]{0}', space=vmem, size = 0x60000, scoped, tag = 'input window, operand 1, single buffered']
    #allocation3 [shape = 's32[1]{0}', space=sflag, size = 0x4, scoped, tag = 'scoped memory for simplenet_forward.1']
    #allocation4 [shape = 'u8[131072]{0}', space=vmem, size = 0x20000, scoped, tag = 'input window, operand 3, single buffered']
    #allocation5 [shape = 's32[1]{0}', space=sflag, size = 0x4, scoped, tag = 'scoped memory for simplenet_forward.1']
    %12 = vsyncpa [#allocation3], 0
    %13 = vsyncpa [#allocation5], 0
    // Predicated region
    $region2: #{simplenet_forward.1} parent=1 // pred_check
      _
    $region3: #{simplenet_forward.1} parent=1 // pred_check_branch
      %15 = sbr.rel (0) target = $region5
    $region4: #{simplenet_forward.1} parent=1 // pred_region
      _
    $region5: #{simplenet_forward.1} parent=1 // pred_fallthru
      _
    // Predicated region
    $region6: #{simplenet_forward.1} parent=1 // pred_check
      _
    $region7: #{simplenet_forward.1} parent=1 // pred_check_branch
      %17 = sbr.rel (0) target = $region9
    $region8: #{simplenet_forward.1} parent=1 // pred_region
      %s19 = ssub.s32 12288, 12288
      %20 = vsyncadd [#allocation3], %s19
      %s21 = sshll.u32 [#allocation2], 4
      %s22 = int_to_ptr.vmem [resolvable:$true] %s21
      %27 = dma.hbm_to_vmem [thread:$0]  %s1, 12288, %s22, [#allocation3], 128, 128, 8
    $region9: #{simplenet_forward.1} parent=1 // pred_fallthru
      _
    // Predicated region
    $region10: #{simplenet_forward.1} parent=1 // pred_check
      _
    $region11: #{simplenet_forward.1} parent=1 // pred_check_branch
      %29 = sbr.rel (0) target = $region13
    $region12: #{simplenet_forward.1} parent=1 // pred_region
      _
    $region13: #{simplenet_forward.1} parent=1 // pred_fallthru
      _
    // Predicated region
    $region14: #{simplenet_forward.1} parent=1 // pred_check
      _
    $region15: #{simplenet_forward.1} parent=1 // pred_check_branch
      %31 = sbr.rel (0) target = $region17
    $region16: #{simplenet_forward.1} parent=1 // pred_region
      %s33 = ssub.s32 4096, 4096
      %34 = vsyncadd [#allocation5], %s33
      %s35 = sshll.u32 [#allocation4], 4
      %s36 = int_to_ptr.vmem [resolvable:$true] %s35
      %41 = dma.hbm_to_vmem [thread:$0]  %s3, 4096, %s36, [#allocation5], 128, 128, 8
    $region17: #{simplenet_forward.1} parent=1 // pred_fallthru
      _
    // Predicated region
    $region18: #{simplenet_forward.1} parent=1 // pred_check
      _
    $region19: #{simplenet_forward.1} parent=1 // pred_check_branch
      %43 = sbr.rel (0) target = $region21
    $region20: #{simplenet_forward.1} parent=1 // pred_region
      _
    $region21: #{simplenet_forward.1} parent=1 // pred_fallthru
      _
    // Predicated region
    $region22: #{simplenet_forward.1} parent=1 // pred_check
      _
    $region23: #{simplenet_forward.1} parent=1 // pred_check_branch
      %45 = sbr.rel (0) target = $region25
    $region24: #{simplenet_forward.1} parent=1 // pred_region
      _
    $region25: #{simplenet_forward.1} parent=1 // pred_fallthru
      _
    // Predicated region
    $region26: #{simplenet_forward.1} parent=1 // pred_check
      _
    $region27: #{simplenet_forward.1} parent=1 // pred_check_branch
      %47 = sbr.rel (0) target = $region29
    $region28: #{simplenet_forward.1} parent=1 // pred_region
      _
    $region29: #{simplenet_forward.1} parent=1 // pred_fallthru
      _
    // Predicated region
    $region30: #{simplenet_forward.1} parent=1 // pred_check
      _
    $region31: #{simplenet_forward.1} parent=1 // pred_check_branch
      %49 = sbr.rel (0) target = $region33
    $region32: #{simplenet_forward.1} parent=1 // pred_region
      %50 = dma.done [#allocation3], 12288
    $region33: #{simplenet_forward.1} parent=1 // pred_fallthru
      _
    // Predicated region
    $region34: #{simplenet_forward.1} parent=1 // pred_check
      _
    $region35: #{simplenet_forward.1} parent=1 // pred_check_branch
      %52 = sbr.rel (0) target = $region37
    $region36: #{simplenet_forward.1} parent=1 // pred_region
      %53 = dma.done [#allocation5], 4096
    $region37: #{simplenet_forward.1} parent=1 // pred_fallthru
      _
    %v55 = vld [vmem:[%s0] sm:$0xff]
    %v56 = vld [vmem:[%s0 + $0x8] sm:$0xff]
    %v57 = vld [vmem:[%s0 + $0x10] sm:$0xff]
    %v58 = vld [vmem:[%s0 + $0x18] sm:$0xff]
    %v59 = vld [vmem:[%s0 + $0x20] sm:$0xff]
    %v60 = vld [vmem:[%s0 + $0x28] sm:$0xff]
    %v61 = vpack.c.bf16 %v55, %v55
    %v62 = vpack.c.bf16 %v56, %v56
    %v63 = vpack.c.bf16 %v57, %v57
    %v64 = vpack.c.bf16 %v58, %v58
    %v65 = vpack.c.bf16 %v59, %v59
    %v66 = vpack.c.bf16 %v60, %v60
    %v67 = vld [vmem:[#allocation2] sm:$0xff]
    %v68 = vld [vmem:[#allocation2 + $0x8] sm:$0xff]
    %v69 = vld [vmem:[#allocation2 + $0x10] sm:$0xff]
    %v70 = vld [vmem:[#allocation2 + $0x18] sm:$0xff]
    %v71 = vld [vmem:[#allocation2 + $0x20] sm:$0xff]
    %v72 = vld [vmem:[#allocation2 + $0x28] sm:$0xff]
    %v73 = vld [vmem:[#allocation2 + $0x30] sm:$0xff]
    %v74 = vld [vmem:[#allocation2 + $0x38] sm:$0xff]
    %v75 = vld [vmem:[#allocation2 + $0x40] sm:$0xff]
    %v76 = vld [vmem:[#allocation2 + $0x48] sm:$0xff]
    %v77 = vld [vmem:[#allocation2 + $0x50] sm:$0xff]
    %v78 = vld [vmem:[#allocation2 + $0x58] sm:$0xff]
    %v79 = vld [vmem:[#allocation2 + $0x60] sm:$0xff]
    %v80 = vld [vmem:[#allocation2 + $0x68] sm:$0xff]
    %v81 = vld [vmem:[#allocation2 + $0x70] sm:$0xff]
    %v82 = vld [vmem:[#allocation2 + $0x78] sm:$0xff]
    %v83 = vld [vmem:[#allocation2 + $0x80] sm:$0xff]
    %v84 = vld [vmem:[#allocation2 + $0x88] sm:$0xff]
    %v85 = vld [vmem:[#allocation2 + $0x90] sm:$0xff]
    %v86 = vld [vmem:[#allocation2 + $0x98] sm:$0xff]
    %v87 = vld [vmem:[#allocation2 + $0xa0] sm:$0xff]
    %v88 = vld [vmem:[#allocation2 + $0xa8] sm:$0xff]
    %v89 = vld [vmem:[#allocation2 + $0xb0] sm:$0xff]
    %v90 = vld [vmem:[#allocation2 + $0xb8] sm:$0xff]
    %v91 = vld [vmem:[#allocation2 + $0xc0] sm:$0xff]
    %v92 = vld [vmem:[#allocation2 + $0xc8] sm:$0xff]
    %v93 = vld [vmem:[#allocation2 + $0xd0] sm:$0xff]
    %v94 = vld [vmem:[#allocation2 + $0xd8] sm:$0xff]
    %v95 = vld [vmem:[#allocation2 + $0xe0] sm:$0xff]
    %v96 = vld [vmem:[#allocation2 + $0xe8] sm:$0xff]
    %v97 = vld [vmem:[#allocation2 + $0xf0] sm:$0xff]
    %v98 = vld [vmem:[#allocation2 + $0xf8] sm:$0xff]
    %v99 = vld [vmem:[#allocation2 + $0x100] sm:$0xff]
    %v100 = vld [vmem:[#allocation2 + $0x108] sm:$0xff]
    %v101 = vld [vmem:[#allocation2 + $0x110] sm:$0xff]
    %v102 = vld [vmem:[#allocation2 + $0x118] sm:$0xff]
    %v103 = vld [vmem:[#allocation2 + $0x120] sm:$0xff]
    %v104 = vld [vmem:[#allocation2 + $0x128] sm:$0xff]
    %v105 = vld [vmem:[#allocation2 + $0x130] sm:$0xff]
    %v106 = vld [vmem:[#allocation2 + $0x138] sm:$0xff]
    %v107 = vld [vmem:[#allocation2 + $0x140] sm:$0xff]
    %v108 = vld [vmem:[#allocation2 + $0x148] sm:$0xff]
    %v109 = vld [vmem:[#allocation2 + $0x150] sm:$0xff]
    %v110 = vld [vmem:[#allocation2 + $0x158] sm:$0xff]
    %v111 = vld [vmem:[#allocation2 + $0x160] sm:$0xff]
    %v112 = vld [vmem:[#allocation2 + $0x168] sm:$0xff]
    %v113 = vld [vmem:[#allocation2 + $0x170] sm:$0xff]
    %v114 = vld [vmem:[#allocation2 + $0x178] sm:$0xff]
    %v115 = vld [vmem:[#allocation2 + $0x180] sm:$0xff]
    %v116 = vld [vmem:[#allocation2 + $0x188] sm:$0xff]
    %v117 = vld [vmem:[#allocation2 + $0x190] sm:$0xff]
    %v118 = vld [vmem:[#allocation2 + $0x198] sm:$0xff]
    %v119 = vld [vmem:[#allocation2 + $0x1a0] sm:$0xff]
    %v120 = vld [vmem:[#allocation2 + $0x1a8] sm:$0xff]
    %v121 = vld [vmem:[#allocation2 + $0x1b0] sm:$0xff]
    %v122 = vld [vmem:[#allocation2 + $0x1b8] sm:$0xff]
    %v123 = vld [vmem:[#allocation2 + $0x1c0] sm:$0xff]
    %v124 = vld [vmem:[#allocation2 + $0x1c8] sm:$0xff]
    %v125 = vld [vmem:[#allocation2 + $0x1d0] sm:$0xff]
    %v126 = vld [vmem:[#allocation2 + $0x1d8] sm:$0xff]
    %v127 = vld [vmem:[#allocation2 + $0x1e0] sm:$0xff]
    %v128 = vld [vmem:[#allocation2 + $0x1e8] sm:$0xff]
    %v129 = vld [vmem:[#allocation2 + $0x1f0] sm:$0xff]
    %v130 = vld [vmem:[#allocation2 + $0x1f8] sm:$0xff]
    %v131 = vld [vmem:[#allocation2 + $0x200] sm:$0xff]
    %v132 = vld [vmem:[#allocation2 + $0x208] sm:$0xff]
    %v133 = vld [vmem:[#allocation2 + $0x210] sm:$0xff]
    %v134 = vld [vmem:[#allocation2 + $0x218] sm:$0xff]
    %v135 = vld [vmem:[#allocation2 + $0x220] sm:$0xff]
    %v136 = vld [vmem:[#allocation2 + $0x228] sm:$0xff]
    %v137 = vld [vmem:[#allocation2 + $0x230] sm:$0xff]
    %v138 = vld [vmem:[#allocation2 + $0x238] sm:$0xff]
    %v139 = vld [vmem:[#allocation2 + $0x240] sm:$0xff]
    %v140 = vld [vmem:[#allocation2 + $0x248] sm:$0xff]
    %v141 = vld [vmem:[#allocation2 + $0x250] sm:$0xff]
    %v142 = vld [vmem:[#allocation2 + $0x258] sm:$0xff]
    %v143 = vld [vmem:[#allocation2 + $0x260] sm:$0xff]
    %v144 = vld [vmem:[#allocation2 + $0x268] sm:$0xff]
    %v145 = vld [vmem:[#allocation2 + $0x270] sm:$0xff]
    %v146 = vld [vmem:[#allocation2 + $0x278] sm:$0xff]
    %v147 = vld [vmem:[#allocation2 + $0x280] sm:$0xff]
    %v148 = vld [vmem:[#allocation2 + $0x288] sm:$0xff]
    %v149 = vld [vmem:[#allocation2 + $0x290] sm:$0xff]
    %v150 = vld [vmem:[#allocation2 + $0x298] sm:$0xff]
    %v151 = vld [vmem:[#allocation2 + $0x2a0] sm:$0xff]
    %v152 = vld [vmem:[#allocation2 + $0x2a8] sm:$0xff]
    %v153 = vld [vmem:[#allocation2 + $0x2b0] sm:$0xff]
    %v154 = vld [vmem:[#allocation2 + $0x2b8] sm:$0xff]
    %v155 = vld [vmem:[#allocation2 + $0x2c0] sm:$0xff]
    %v156 = vld [vmem:[#allocation2 + $0x2c8] sm:$0xff]
    %v157 = vld [vmem:[#allocation2 + $0x2d0] sm:$0xff]
    %v158 = vld [vmem:[#allocation2 + $0x2d8] sm:$0xff]
    %v159 = vld [vmem:[#allocation2 + $0x2e0] sm:$0xff]
    %v160 = vld [vmem:[#allocation2 + $0x2e8] sm:$0xff]
    %v161 = vld [vmem:[#allocation2 + $0x2f0] sm:$0xff]
    %v162 = vld [vmem:[#allocation2 + $0x2f8] sm:$0xff]
    %v163 = vld [vmem:[%s2] sm:$0x3]
    %v165 = vlaneseq
    %v166 = vshrl.u32 %v165, 7
    %v167 = vsub.s32 0, %v166
    %v168 = vrot.slane %v163, %v167
    %v169 = vlaneseq
    %v170 = vshrl.u32 %v169, 7
    %v171 = vsub.s32 1, %v170
    %v172 = vrot.slane %v163, %v171
    %v271 = vunpack.c.l.b16 %v67
    %v272 = vunpack.c.h.b16 %v67
    %v273 = vunpack.c.l.b16 %v68
    %v274 = vunpack.c.h.b16 %v68
    %v275 = vunpack.c.l.b16 %v69
    %v276 = vunpack.c.h.b16 %v69
    %v277 = vunpack.c.l.b16 %v70
    %v278 = vunpack.c.h.b16 %v70
    %v279 = vunpack.c.l.b16 %v71
    %v280 = vunpack.c.h.b16 %v71
    %v281 = vunpack.c.l.b16 %v72
    %v282 = vunpack.c.h.b16 %v72
    %v283 = vunpack.c.l.b16 %v73
    %v284 = vunpack.c.h.b16 %v73
    %v285 = vunpack.c.l.b16 %v74
    %v286 = vunpack.c.h.b16 %v74
    %v287 = vunpack.c.l.b16 %v75
    %v288 = vunpack.c.h.b16 %v75
    %v289 = vunpack.c.l.b16 %v76
    %v290 = vunpack.c.h.b16 %v76
    %v291 = vunpack.c.l.b16 %v77
    %v292 = vunpack.c.h.b16 %v77
    %v293 = vunpack.c.l.b16 %v78
    %v294 = vunpack.c.h.b16 %v78
    %v295 = vunpack.c.l.b16 %v79
    %v296 = vunpack.c.h.b16 %v79
    %v297 = vunpack.c.l.b16 %v80
    %v298 = vunpack.c.h.b16 %v80
    %v299 = vunpack.c.l.b16 %v81
    %v300 = vunpack.c.h.b16 %v81
    %v301 = vunpack.c.l.b16 %v82
    %v302 = vunpack.c.h.b16 %v82
    %v303 = vunpack.c.l.b16 %v83
    %v304 = vunpack.c.h.b16 %v83
    %v305 = vunpack.c.l.b16 %v84
    %v306 = vunpack.c.h.b16 %v84
    %v307 = vunpack.c.l.b16 %v85
    %v308 = vunpack.c.h.b16 %v85
    %v309 = vunpack.c.l.b16 %v86
    %v310 = vunpack.c.h.b16 %v86
    %v311 = vunpack.c.l.b16 %v87
    %v312 = vunpack.c.h.b16 %v87
    %v313 = vunpack.c.l.b16 %v88
    %v314 = vunpack.c.h.b16 %v88
    %v315 = vunpack.c.l.b16 %v89
    %v316 = vunpack.c.h.b16 %v89
    %v317 = vunpack.c.l.b16 %v90
    %v318 = vunpack.c.h.b16 %v90
    %v319 = vunpack.c.l.b16 %v91
    %v320 = vunpack.c.h.b16 %v91
    %v321 = vunpack.c.l.b16 %v92
    %v322 = vunpack.c.h.b16 %v92
    %v323 = vunpack.c.l.b16 %v93
    %v324 = vunpack.c.h.b16 %v93
    %v325 = vunpack.c.l.b16 %v94
    %v326 = vunpack.c.h.b16 %v94
    %v327 = vunpack.c.l.b16 %v95
    %v328 = vunpack.c.h.b16 %v95
    %v329 = vunpack.c.l.b16 %v96
    %v330 = vunpack.c.h.b16 %v96
    %v331 = vunpack.c.l.b16 %v97
    %v332 = vunpack.c.h.b16 %v97
    %v333 = vunpack.c.l.b16 %v98
    %v334 = vunpack.c.h.b16 %v98
    %v335 = vunpack.c.l.b16 %v99
    %v336 = vunpack.c.h.b16 %v99
    %v337 = vunpack.c.l.b16 %v100
    %v338 = vunpack.c.h.b16 %v100
    %v339 = vunpack.c.l.b16 %v101
    %v340 = vunpack.c.h.b16 %v101
    %v341 = vunpack.c.l.b16 %v102
    %v342 = vunpack.c.h.b16 %v102
    %v343 = vunpack.c.l.b16 %v103
    %v344 = vunpack.c.h.b16 %v103
    %v345 = vunpack.c.l.b16 %v104
    %v346 = vunpack.c.h.b16 %v104
    %v347 = vunpack.c.l.b16 %v105
    %v348 = vunpack.c.h.b16 %v105
    %v349 = vunpack.c.l.b16 %v106
    %v350 = vunpack.c.h.b16 %v106
    %v351 = vunpack.c.l.b16 %v107
    %v352 = vunpack.c.h.b16 %v107
    %v353 = vunpack.c.l.b16 %v108
    %v354 = vunpack.c.h.b16 %v108
    %v355 = vunpack.c.l.b16 %v109
    %v356 = vunpack.c.h.b16 %v109
    %v357 = vunpack.c.l.b16 %v110
    %v358 = vunpack.c.h.b16 %v110
    %v359 = vunpack.c.l.b16 %v111
    %v360 = vunpack.c.h.b16 %v111
    %v361 = vunpack.c.l.b16 %v112
    %v362 = vunpack.c.h.b16 %v112
    %v363 = vunpack.c.l.b16 %v113
    %v364 = vunpack.c.h.b16 %v113
    %v365 = vunpack.c.l.b16 %v114
    %v366 = vunpack.c.h.b16 %v114
    %v367 = vunpack.c.l.b16 %v115
    %v368 = vunpack.c.h.b16 %v115
    %v369 = vunpack.c.l.b16 %v116
    %v370 = vunpack.c.h.b16 %v116
    %v371 = vunpack.c.l.b16 %v117
    %v372 = vunpack.c.h.b16 %v117
    %v373 = vunpack.c.l.b16 %v118
    %v374 = vunpack.c.h.b16 %v118
    %v375 = vunpack.c.l.b16 %v119
    %v376 = vunpack.c.h.b16 %v119
    %v377 = vunpack.c.l.b16 %v120
    %v378 = vunpack.c.h.b16 %v120
    %v379 = vunpack.c.l.b16 %v121
    %v380 = vunpack.c.h.b16 %v121
    %v381 = vunpack.c.l.b16 %v122
    %v382 = vunpack.c.h.b16 %v122
    %v383 = vunpack.c.l.b16 %v123
    %v384 = vunpack.c.h.b16 %v123
    %v385 = vunpack.c.l.b16 %v124
    %v386 = vunpack.c.h.b16 %v124
    %v387 = vunpack.c.l.b16 %v125
    %v388 = vunpack.c.h.b16 %v125
    %v389 = vunpack.c.l.b16 %v126
    %v390 = vunpack.c.h.b16 %v126
    %v391 = vunpack.c.l.b16 %v127
    %v392 = vunpack.c.h.b16 %v127
    %v393 = vunpack.c.l.b16 %v128
    %v394 = vunpack.c.h.b16 %v128
    %v395 = vunpack.c.l.b16 %v129
    %v396 = vunpack.c.h.b16 %v129
    %v397 = vunpack.c.l.b16 %v130
    %v398 = vunpack.c.h.b16 %v130
    %v399 = vunpack.c.l.b16 %v131
    %v400 = vunpack.c.h.b16 %v131
    %v401 = vunpack.c.l.b16 %v132
    %v402 = vunpack.c.h.b16 %v132
    %v403 = vunpack.c.l.b16 %v133
    %v404 = vunpack.c.h.b16 %v133
    %v405 = vunpack.c.l.b16 %v134
    %v406 = vunpack.c.h.b16 %v134
    %v407 = vunpack.c.l.b16 %v135
    %v408 = vunpack.c.h.b16 %v135
    %v409 = vunpack.c.l.b16 %v136
    %v410 = vunpack.c.h.b16 %v136
    %v411 = vunpack.c.l.b16 %v137
    %v412 = vunpack.c.h.b16 %v137
    %v413 = vunpack.c.l.b16 %v138
    %v414 = vunpack.c.h.b16 %v138
    %v415 = vunpack.c.l.b16 %v139
    %v416 = vunpack.c.h.b16 %v139
    %v417 = vunpack.c.l.b16 %v140
    %v418 = vunpack.c.h.b16 %v140
    %v419 = vunpack.c.l.b16 %v141
    %v420 = vunpack.c.h.b16 %v141
    %v421 = vunpack.c.l.b16 %v142
    %v422 = vunpack.c.h.b16 %v142
    %v423 = vunpack.c.l.b16 %v143
    %v424 = vunpack.c.h.b16 %v143
    %v425 = vunpack.c.l.b16 %v144
    %v426 = vunpack.c.h.b16 %v144
    %v427 = vunpack.c.l.b16 %v145
    %v428 = vunpack.c.h.b16 %v145
    %v429 = vunpack.c.l.b16 %v146
    %v430 = vunpack.c.h.b16 %v146
    %v431 = vunpack.c.l.b16 %v147
    %v432 = vunpack.c.h.b16 %v147
    %v433 = vunpack.c.l.b16 %v148
    %v434 = vunpack.c.h.b16 %v148
    %v435 = vunpack.c.l.b16 %v149
    %v436 = vunpack.c.h.b16 %v149
    %v437 = vunpack.c.l.b16 %v150
    %v438 = vunpack.c.h.b16 %v150
    %v439 = vunpack.c.l.b16 %v151
    %v440 = vunpack.c.h.b16 %v151
    %v441 = vunpack.c.l.b16 %v152
    %v442 = vunpack.c.h.b16 %v152
    %v443 = vunpack.c.l.b16 %v153
    %v444 = vunpack.c.h.b16 %v153
    %v445 = vunpack.c.l.b16 %v154
    %v446 = vunpack.c.h.b16 %v154
    %v447 = vunpack.c.l.b16 %v155
    %v448 = vunpack.c.h.b16 %v155
    %v449 = vunpack.c.l.b16 %v156
    %v450 = vunpack.c.h.b16 %v156
    %v451 = vunpack.c.l.b16 %v157
    %v452 = vunpack.c.h.b16 %v157
    %v453 = vunpack.c.l.b16 %v158
    %v454 = vunpack.c.h.b16 %v158
    %v455 = vunpack.c.l.b16 %v159
    %v456 = vunpack.c.h.b16 %v159
    %v457 = vunpack.c.l.b16 %v160
    %v458 = vunpack.c.h.b16 %v160
    %v459 = vunpack.c.l.b16 %v161
    %v460 = vunpack.c.h.b16 %v161
    %v461 = vunpack.c.l.b16 %v162
    %v462 = vunpack.c.h.b16 %v162
    %v463 = vpack.c.b16 %v273, %v271
    %v464 = vpack.c.b16 %v274, %v272
    %v465 = vpack.c.b16 %v277, %v275
    %v466 = vpack.c.b16 %v278, %v276
    %v467 = vpack.c.b16 %v281, %v279
    %v468 = vpack.c.b16 %v282, %v280
    %v469 = vpack.c.b16 %v285, %v283
    %v470 = vpack.c.b16 %v286, %v284
    %v471 = vpack.c.b16 %v289, %v287
    %v472 = vpack.c.b16 %v290, %v288
    %v473 = vpack.c.b16 %v293, %v291
    %v474 = vpack.c.b16 %v294, %v292
    %v475 = vpack.c.b16 %v297, %v295
    %v476 = vpack.c.b16 %v298, %v296
    %v477 = vpack.c.b16 %v301, %v299
    %v478 = vpack.c.b16 %v302, %v300
    %v479 = vpack.c.b16 %v305, %v303
    %v480 = vpack.c.b16 %v306, %v304
    %v481 = vpack.c.b16 %v309, %v307
    %v482 = vpack.c.b16 %v310, %v308
    %v483 = vpack.c.b16 %v313, %v311
    %v484 = vpack.c.b16 %v314, %v312
    %v485 = vpack.c.b16 %v317, %v315
    %v486 = vpack.c.b16 %v318, %v316
    %v487 = vpack.c.b16 %v321, %v319
    %v488 = vpack.c.b16 %v322, %v320
    %v489 = vpack.c.b16 %v325, %v323
    %v490 = vpack.c.b16 %v326, %v324
    %v491 = vpack.c.b16 %v329, %v327
    %v492 = vpack.c.b16 %v330, %v328
    %v493 = vpack.c.b16 %v333, %v331
    %v494 = vpack.c.b16 %v334, %v332
    %v495 = vpack.c.b16 %v337, %v335
    %v496 = vpack.c.b16 %v338, %v336
    %v497 = vpack.c.b16 %v341, %v339
    %v498 = vpack.c.b16 %v342, %v340
    %v499 = vpack.c.b16 %v345, %v343
    %v500 = vpack.c.b16 %v346, %v344
    %v501 = vpack.c.b16 %v349, %v347
    %v502 = vpack.c.b16 %v350, %v348
    %v503 = vpack.c.b16 %v353, %v351
    %v504 = vpack.c.b16 %v354, %v352
    %v505 = vpack.c.b16 %v357, %v355
    %v506 = vpack.c.b16 %v358, %v356
    %v507 = vpack.c.b16 %v361, %v359
    %v508 = vpack.c.b16 %v362, %v360
    %v509 = vpack.c.b16 %v365, %v363
    %v510 = vpack.c.b16 %v366, %v364
    %v511 = vpack.c.b16 %v369, %v367
    %v512 = vpack.c.b16 %v370, %v368
    %v513 = vpack.c.b16 %v373, %v371
    %v514 = vpack.c.b16 %v374, %v372
    %v515 = vpack.c.b16 %v377, %v375
    %v516 = vpack.c.b16 %v378, %v376
    %v517 = vpack.c.b16 %v381, %v379
    %v518 = vpack.c.b16 %v382, %v380
    %v519 = vpack.c.b16 %v385, %v383
    %v520 = vpack.c.b16 %v386, %v384
    %v521 = vpack.c.b16 %v389, %v387
    %v522 = vpack.c.b16 %v390, %v388
    %v523 = vpack.c.b16 %v393, %v391
    %v524 = vpack.c.b16 %v394, %v392
    %v525 = vpack.c.b16 %v397, %v395
    %v526 = vpack.c.b16 %v398, %v396
    %v527 = vpack.c.b16 %v401, %v399
    %v528 = vpack.c.b16 %v402, %v400
    %v529 = vpack.c.b16 %v405, %v403
    %v530 = vpack.c.b16 %v406, %v404
    %v531 = vpack.c.b16 %v409, %v407
    %v532 = vpack.c.b16 %v410, %v408
    %v533 = vpack.c.b16 %v413, %v411
    %v534 = vpack.c.b16 %v414, %v412
    %v535 = vpack.c.b16 %v417, %v415
    %v536 = vpack.c.b16 %v418, %v416
    %v537 = vpack.c.b16 %v421, %v419
    %v538 = vpack.c.b16 %v422, %v420
    %v539 = vpack.c.b16 %v425, %v423
    %v540 = vpack.c.b16 %v426, %v424
    %v541 = vpack.c.b16 %v429, %v427
    %v542 = vpack.c.b16 %v430, %v428
    %v543 = vpack.c.b16 %v433, %v431
    %v544 = vpack.c.b16 %v434, %v432
    %v545 = vpack.c.b16 %v437, %v435
    %v546 = vpack.c.b16 %v438, %v436
    %v547 = vpack.c.b16 %v441, %v439
    %v548 = vpack.c.b16 %v442, %v440
    %v549 = vpack.c.b16 %v445, %v443
    %v550 = vpack.c.b16 %v446, %v444
    %v551 = vpack.c.b16 %v449, %v447
    %v552 = vpack.c.b16 %v450, %v448
    %v553 = vpack.c.b16 %v453, %v451
    %v554 = vpack.c.b16 %v454, %v452
    %v555 = vpack.c.b16 %v457, %v455
    %v556 = vpack.c.b16 %v458, %v456
    %v557 = vpack.c.b16 %v461, %v459
    %v558 = vpack.c.b16 %v462, %v460
    %655 = vmatprep.subr.bf16.mxu0 %v464
    %656 = vmatpush1.bf16.msra.mxu0 %v463
    %657 = vmatprep.subr.bf16.mxu0 %v466
    %658 = vmatpush1.bf16.msra.mxu0 %v465
    %659 = vmatprep.subr.bf16.mxu0 %v468
    %660 = vmatpush1.bf16.msra.mxu0 %v467
    %661 = vmatprep.subr.bf16.mxu0 %v470
    %662 = vmatpush1.bf16.msra.mxu0 %v469
    %663 = vmatprep.subr.bf16.mxu0 %v472
    %664 = vmatpush1.bf16.msra.mxu0 %v471
    %665 = vmatprep.subr.bf16.mxu0 %v474
    %666 = vmatpush1.bf16.msra.mxu0 %v473
    %667 = vmatprep.subr.bf16.mxu0 %v476
    %668 = vmatpush1.bf16.msra.mxu0 %v475
    %669 = vmatprep.subr.bf16.mxu0 %v478
    %670 = vmatpush1.bf16.msra.mxu0 %v477
    %671 = vmatprep.subr.bf16.mxu0 %v480
    %672 = vmatpush1.bf16.msra.mxu0 %v479
    %673 = vmatprep.subr.bf16.mxu0 %v482
    %674 = vmatpush1.bf16.msra.mxu0 %v481
    %675 = vmatprep.subr.bf16.mxu0 %v484
    %676 = vmatpush1.bf16.msra.mxu0 %v483
    %677 = vmatprep.subr.bf16.mxu0 %v486
    %678 = vmatpush1.bf16.msra.mxu0 %v485
    %679 = vmatprep.subr.bf16.mxu0 %v488
    %680 = vmatpush1.bf16.msra.mxu0 %v487
    %681 = vmatprep.subr.bf16.mxu0 %v490
    %682 = vmatpush1.bf16.msra.mxu0 %v489
    %683 = vmatprep.subr.bf16.mxu0 %v492
    %684 = vmatpush1.bf16.msra.mxu0 %v491
    %685 = vmatprep.subr.bf16.mxu0 %v494
    %686 = vmatpush1.bf16.msra.mxu0 %v493
    %687 = vmatprep.mubr.bf16.mxu0 %v62
    %688 = vmatmul.mubr.bf16.gmra.mrb[0].mxu0 %v61
    %v689 = vpop.f32.mrb[0].mxu0
    %v690 = vadd.f32 %v168, %v689
    %v691 = vpop.f32.mrb[0].mxu0
    %v692 = vadd.f32 %v172, %v691
    %v693 = vpop.f32.mrb[0].mxu0
    %v694 = vpop.f32.mrb[0].mxu0
    %695 = vdwg.mxu0
    %696 = vmatprep.subr.bf16.mxu0 %v496
    %697 = vmatpush1.bf16.msra.mxu0 %v495
    %698 = vmatprep.subr.bf16.mxu0 %v498
    %699 = vmatpush1.bf16.msra.mxu0 %v497
    %700 = vmatprep.subr.bf16.mxu0 %v500
    %701 = vmatpush1.bf16.msra.mxu0 %v499
    %702 = vmatprep.subr.bf16.mxu0 %v502
    %703 = vmatpush1.bf16.msra.mxu0 %v501
    %704 = vmatprep.subr.bf16.mxu0 %v504
    %705 = vmatpush1.bf16.msra.mxu0 %v503
    %706 = vmatprep.subr.bf16.mxu0 %v506
    %707 = vmatpush1.bf16.msra.mxu0 %v505
    %708 = vmatprep.subr.bf16.mxu0 %v508
    %709 = vmatpush1.bf16.msra.mxu0 %v507
    %710 = vmatprep.subr.bf16.mxu0 %v510
    %711 = vmatpush1.bf16.msra.mxu0 %v509
    %712 = vmatprep.subr.bf16.mxu0 %v512
    %713 = vmatpush1.bf16.msra.mxu0 %v511
    %714 = vmatprep.subr.bf16.mxu0 %v514
    %715 = vmatpush1.bf16.msra.mxu0 %v513
    %716 = vmatprep.subr.bf16.mxu0 %v516
    %717 = vmatpush1.bf16.msra.mxu0 %v515
    %718 = vmatprep.subr.bf16.mxu0 %v518
    %719 = vmatpush1.bf16.msra.mxu0 %v517
    %720 = vmatprep.subr.bf16.mxu0 %v520
    %721 = vmatpush1.bf16.msra.mxu0 %v519
    %722 = vmatprep.subr.bf16.mxu0 %v522
    %723 = vmatpush1.bf16.msra.mxu0 %v521
    %724 = vmatprep.subr.bf16.mxu0 %v524
    %725 = vmatpush1.bf16.msra.mxu0 %v523
    %726 = vmatprep.subr.bf16.mxu0 %v526
    %727 = vmatpush1.bf16.msra.mxu0 %v525
    %728 = vmatprep.mubr.bf16.mxu0 %v64
    %729 = vmatmul.mubr.bf16.gmra.mrb[0].mxu0 %v63
    %v730 = vpop.f32.mrb[0].mxu0
    %v731 = vadd.f32 %v690, %v730
    %v732 = vpop.f32.mrb[0].mxu0
    %v733 = vadd.f32 %v692, %v732
    %v734 = vpop.f32.mrb[0].mxu0
    %v735 = vpop.f32.mrb[0].mxu0
    %736 = vdwg.mxu0
    %737 = vmatprep.subr.bf16.mxu0 %v528
    %738 = vmatpush1.bf16.msra.mxu0 %v527
    %739 = vmatprep.subr.bf16.mxu0 %v530
    %740 = vmatpush1.bf16.msra.mxu0 %v529
    %741 = vmatprep.subr.bf16.mxu0 %v532
    %742 = vmatpush1.bf16.msra.mxu0 %v531
    %743 = vmatprep.subr.bf16.mxu0 %v534
    %744 = vmatpush1.bf16.msra.mxu0 %v533
    %745 = vmatprep.subr.bf16.mxu0 %v536
    %746 = vmatpush1.bf16.msra.mxu0 %v535
    %747 = vmatprep.subr.bf16.mxu0 %v538
    %748 = vmatpush1.bf16.msra.mxu0 %v537
    %749 = vmatprep.subr.bf16.mxu0 %v540
    %750 = vmatpush1.bf16.msra.mxu0 %v539
    %751 = vmatprep.subr.bf16.mxu0 %v542
    %752 = vmatpush1.bf16.msra.mxu0 %v541
    %753 = vmatprep.subr.bf16.mxu0 %v544
    %754 = vmatpush1.bf16.msra.mxu0 %v543
    %755 = vmatprep.subr.bf16.mxu0 %v546
    %756 = vmatpush1.bf16.msra.mxu0 %v545
    %757 = vmatprep.subr.bf16.mxu0 %v548
    %758 = vmatpush1.bf16.msra.mxu0 %v547
    %759 = vmatprep.subr.bf16.mxu0 %v550
    %760 = vmatpush1.bf16.msra.mxu0 %v549
    %761 = vmatprep.subr.bf16.mxu0 %v552
    %762 = vmatpush1.bf16.msra.mxu0 %v551
    %763 = vmatprep.subr.bf16.mxu0 %v554
    %764 = vmatpush1.bf16.msra.mxu0 %v553
    %765 = vmatprep.subr.bf16.mxu0 %v556
    %766 = vmatpush1.bf16.msra.mxu0 %v555
    %767 = vmatprep.subr.bf16.mxu0 %v558
    %768 = vmatpush1.bf16.msra.mxu0 %v557
    %769 = vmatprep.mubr.bf16.mxu0 %v66
    %770 = vmatmul.mubr.bf16.gmra.mrb[0].mxu0 %v65
    %v771 = vpop.f32.mrb[0].mxu0
    %v772 = vadd.f32 %v731, %v771
    %v773 = vpop.f32.mrb[0].mxu0
    %v774 = vadd.f32 %v733, %v773
    %v775 = vpop.f32.mrb[0].mxu0
    %v776 = vpop.f32.mrb[0].mxu0
    %777 = vdwg.mxu0
    %v778 = vmax.f32 %v772, 0.0
    %v779 = vmax.f32 %v774, 0.0
    %v780 = vpack.c.bf16 %v778, %v778
    %v781 = vpack.c.bf16 %v779, %v779
    %v782 = vld [vmem:[#allocation4] sm:$0xff]
    %v783 = vld [vmem:[#allocation4 + $0x8] sm:$0xff]
    %v784 = vld [vmem:[#allocation4 + $0x10] sm:$0xff]
    %v785 = vld [vmem:[#allocation4 + $0x18] sm:$0xff]
    %v786 = vld [vmem:[#allocation4 + $0x20] sm:$0xff]
    %v787 = vld [vmem:[#allocation4 + $0x28] sm:$0xff]
    %v788 = vld [vmem:[#allocation4 + $0x30] sm:$0xff]
    %v789 = vld [vmem:[#allocation4 + $0x38] sm:$0xff]
    %v790 = vld [vmem:[#allocation4 + $0x40] sm:$0xff]
    %v791 = vld [vmem:[#allocation4 + $0x48] sm:$0xff]
    %v792 = vld [vmem:[#allocation4 + $0x50] sm:$0xff]
    %v793 = vld [vmem:[#allocation4 + $0x58] sm:$0xff]
    %v794 = vld [vmem:[#allocation4 + $0x60] sm:$0xff]
    %v795 = vld [vmem:[#allocation4 + $0x68] sm:$0xff]
    %v796 = vld [vmem:[#allocation4 + $0x70] sm:$0xff]
    %v797 = vld [vmem:[#allocation4 + $0x78] sm:$0xff]
    %v798 = vld [vmem:[#allocation4 + $0x80] sm:$0xff]
    %v799 = vld [vmem:[#allocation4 + $0x88] sm:$0xff]
    %v800 = vld [vmem:[#allocation4 + $0x90] sm:$0xff]
    %v801 = vld [vmem:[#allocation4 + $0x98] sm:$0xff]
    %v802 = vld [vmem:[#allocation4 + $0xa0] sm:$0xff]
    %v803 = vld [vmem:[#allocation4 + $0xa8] sm:$0xff]
    %v804 = vld [vmem:[#allocation4 + $0xb0] sm:$0xff]
    %v805 = vld [vmem:[#allocation4 + $0xb8] sm:$0xff]
    %v806 = vld [vmem:[#allocation4 + $0xc0] sm:$0xff]
    %v807 = vld [vmem:[#allocation4 + $0xc8] sm:$0xff]
    %v808 = vld [vmem:[#allocation4 + $0xd0] sm:$0xff]
    %v809 = vld [vmem:[#allocation4 + $0xd8] sm:$0xff]
    %v810 = vld [vmem:[#allocation4 + $0xe0] sm:$0xff]
    %v811 = vld [vmem:[#allocation4 + $0xe8] sm:$0xff]
    %v812 = vld [vmem:[#allocation4 + $0xf0] sm:$0xff]
    %v813 = vld [vmem:[#allocation4 + $0xf8] sm:$0xff]
    %v814 = vld [vmem:[%s4] sm:$0x3]
    %v816 = vlaneseq
    %v817 = vshrl.u32 %v816, 7
    %v818 = vsub.s32 0, %v817
    %v819 = vrot.slane %v814, %v818
    %v820 = vlaneseq
    %v821 = vshrl.u32 %v820, 7
    %v822 = vsub.s32 1, %v821
    %v823 = vrot.slane %v814, %v822
    %v858 = vunpack.c.l.b16 %v782
    %v859 = vunpack.c.h.b16 %v782
    %v860 = vunpack.c.l.b16 %v783
    %v861 = vunpack.c.h.b16 %v783
    %v862 = vunpack.c.l.b16 %v784
    %v863 = vunpack.c.h.b16 %v784
    %v864 = vunpack.c.l.b16 %v785
    %v865 = vunpack.c.h.b16 %v785
    %v866 = vunpack.c.l.b16 %v786
    %v867 = vunpack.c.h.b16 %v786
    %v868 = vunpack.c.l.b16 %v787
    %v869 = vunpack.c.h.b16 %v787
    %v870 = vunpack.c.l.b16 %v788
    %v871 = vunpack.c.h.b16 %v788
    %v872 = vunpack.c.l.b16 %v789
    %v873 = vunpack.c.h.b16 %v789
    %v874 = vunpack.c.l.b16 %v790
    %v875 = vunpack.c.h.b16 %v790
    %v876 = vunpack.c.l.b16 %v791
    %v877 = vunpack.c.h.b16 %v791
    %v878 = vunpack.c.l.b16 %v792
    %v879 = vunpack.c.h.b16 %v792
    %v880 = vunpack.c.l.b16 %v793
    %v881 = vunpack.c.h.b16 %v793
    %v882 = vunpack.c.l.b16 %v794
    %v883 = vunpack.c.h.b16 %v794
    %v884 = vunpack.c.l.b16 %v795
    %v885 = vunpack.c.h.b16 %v795
    %v886 = vunpack.c.l.b16 %v796
    %v887 = vunpack.c.h.b16 %v796
    %v888 = vunpack.c.l.b16 %v797
    %v889 = vunpack.c.h.b16 %v797
    %v890 = vunpack.c.l.b16 %v798
    %v891 = vunpack.c.h.b16 %v798
    %v892 = vunpack.c.l.b16 %v799
    %v893 = vunpack.c.h.b16 %v799
    %v894 = vunpack.c.l.b16 %v800
    %v895 = vunpack.c.h.b16 %v800
    %v896 = vunpack.c.l.b16 %v801
    %v897 = vunpack.c.h.b16 %v801
    %v898 = vunpack.c.l.b16 %v802
    %v899 = vunpack.c.h.b16 %v802
    %v900 = vunpack.c.l.b16 %v803
    %v901 = vunpack.c.h.b16 %v803
    %v902 = vunpack.c.l.b16 %v804
    %v903 = vunpack.c.h.b16 %v804
    %v904 = vunpack.c.l.b16 %v805
    %v905 = vunpack.c.h.b16 %v805
    %v906 = vunpack.c.l.b16 %v806
    %v907 = vunpack.c.h.b16 %v806
    %v908 = vunpack.c.l.b16 %v807
    %v909 = vunpack.c.h.b16 %v807
    %v910 = vunpack.c.l.b16 %v808
    %v911 = vunpack.c.h.b16 %v808
    %v912 = vunpack.c.l.b16 %v809
    %v913 = vunpack.c.h.b16 %v809
    %v914 = vunpack.c.l.b16 %v810
    %v915 = vunpack.c.h.b16 %v810
    %v916 = vunpack.c.l.b16 %v811
    %v917 = vunpack.c.h.b16 %v811
    %v918 = vunpack.c.l.b16 %v812
    %v919 = vunpack.c.h.b16 %v812
    %v920 = vunpack.c.l.b16 %v813
    %v921 = vunpack.c.h.b16 %v813
    %v922 = vpack.c.b16 %v860, %v858
    %v923 = vpack.c.b16 %v861, %v859
    %v924 = vpack.c.b16 %v864, %v862
    %v925 = vpack.c.b16 %v865, %v863
    %v926 = vpack.c.b16 %v868, %v866
    %v927 = vpack.c.b16 %v869, %v867
    %v928 = vpack.c.b16 %v872, %v870
    %v929 = vpack.c.b16 %v873, %v871
    %v930 = vpack.c.b16 %v876, %v874
    %v931 = vpack.c.b16 %v877, %v875
    %v932 = vpack.c.b16 %v880, %v878
    %v933 = vpack.c.b16 %v881, %v879
    %v934 = vpack.c.b16 %v884, %v882
    %v935 = vpack.c.b16 %v885, %v883
    %v936 = vpack.c.b16 %v888, %v886
    %v937 = vpack.c.b16 %v889, %v887
    %v938 = vpack.c.b16 %v892, %v890
    %v939 = vpack.c.b16 %v893, %v891
    %v940 = vpack.c.b16 %v896, %v894
    %v941 = vpack.c.b16 %v897, %v895
    %v942 = vpack.c.b16 %v900, %v898
    %v943 = vpack.c.b16 %v901, %v899
    %v944 = vpack.c.b16 %v904, %v902
    %v945 = vpack.c.b16 %v905, %v903
    %v946 = vpack.c.b16 %v908, %v906
    %v947 = vpack.c.b16 %v909, %v907
    %v948 = vpack.c.b16 %v912, %v910
    %v949 = vpack.c.b16 %v913, %v911
    %v950 = vpack.c.b16 %v916, %v914
    %v951 = vpack.c.b16 %v917, %v915
    %v952 = vpack.c.b16 %v920, %v918
    %v953 = vpack.c.b16 %v921, %v919
    %986 = vmatprep.subr.bf16.mxu0 %v923
    %987 = vmatpush1.bf16.msra.mxu0 %v922
    %988 = vmatprep.subr.bf16.mxu0 %v925
    %989 = vmatpush1.bf16.msra.mxu0 %v924
    %990 = vmatprep.subr.bf16.mxu0 %v927
    %991 = vmatpush1.bf16.msra.mxu0 %v926
    %992 = vmatprep.subr.bf16.mxu0 %v929
    %993 = vmatpush1.bf16.msra.mxu0 %v928
    %994 = vmatprep.subr.bf16.mxu0 %v931
    %995 = vmatpush1.bf16.msra.mxu0 %v930
    %996 = vmatprep.subr.bf16.mxu0 %v933
    %997 = vmatpush1.bf16.msra.mxu0 %v932
    %998 = vmatprep.subr.bf16.mxu0 %v935
    %999 = vmatpush1.bf16.msra.mxu0 %v934
    %1000 = vmatprep.subr.bf16.mxu0 %v937
    %1001 = vmatpush1.bf16.msra.mxu0 %v936
    %1002 = vmatprep.subr.bf16.mxu0 %v939
    %1003 = vmatpush1.bf16.msra.mxu0 %v938
    %1004 = vmatprep.subr.bf16.mxu0 %v941
    %1005 = vmatpush1.bf16.msra.mxu0 %v940
    %1006 = vmatprep.subr.bf16.mxu0 %v943
    %1007 = vmatpush1.bf16.msra.mxu0 %v942
    %1008 = vmatprep.subr.bf16.mxu0 %v945
    %1009 = vmatpush1.bf16.msra.mxu0 %v944
    %1010 = vmatprep.subr.bf16.mxu0 %v947
    %1011 = vmatpush1.bf16.msra.mxu0 %v946
    %1012 = vmatprep.subr.bf16.mxu0 %v949
    %1013 = vmatpush1.bf16.msra.mxu0 %v948
    %1014 = vmatprep.subr.bf16.mxu0 %v951
    %1015 = vmatpush1.bf16.msra.mxu0 %v950
    %1016 = vmatprep.subr.bf16.mxu0 %v953
    %1017 = vmatpush1.bf16.msra.mxu0 %v952
    %1018 = vmatprep.mubr.bf16.mxu0 %v781
    %1019 = vmatmul.mubr.bf16.gmra.mrb[0].mxu0 %v780
    %v1020 = vpop.f32.mrb[0].mxu0
    %v1021 = vadd.f32 %v819, %v1020
    %v1022 = vpop.f32.mrb[0].mxu0
    %v1023 = vadd.f32 %v823, %v1022
    %v1024 = vpop.f32.mrb[0].mxu0
    %v1025 = vpop.f32.mrb[0].mxu0
    %1026 = vdwg.mxu0
    %v1027 = vmax.f32 %v1021, 0.0
    %v1028 = vmax.f32 %v1023, 0.0
    %v1029 = vpack.c.bf16 %v1027, %v1027
    %v1030 = vpack.c.bf16 %v1028, %v1028
    %1031 = vmatprep.subr.bf16.mxu0 %v923
    %1032 = vmatpush1.bf16.msra.mxu0 %v922
    %1033 = vmatprep.subr.bf16.mxu0 %v925
    %1034 = vmatpush1.bf16.msra.mxu0 %v924
    %1035 = vmatprep.subr.bf16.mxu0 %v927
    %1036 = vmatpush1.bf16.msra.mxu0 %v926
    %1037 = vmatprep.subr.bf16.mxu0 %v929
    %1038 = vmatpush1.bf16.msra.mxu0 %v928
    %1039 = vmatprep.subr.bf16.mxu0 %v931
    %1040 = vmatpush1.bf16.msra.mxu0 %v930
    %1041 = vmatprep.subr.bf16.mxu0 %v933
    %1042 = vmatpush1.bf16.msra.mxu0 %v932
    %1043 = vmatprep.subr.bf16.mxu0 %v935
    %1044 = vmatpush1.bf16.msra.mxu0 %v934
    %1045 = vmatprep.subr.bf16.mxu0 %v937
    %1046 = vmatpush1.bf16.msra.mxu0 %v936
    %1047 = vmatprep.subr.bf16.mxu0 %v939
    %1048 = vmatpush1.bf16.msra.mxu0 %v938
    %1049 = vmatprep.subr.bf16.mxu0 %v941
    %1050 = vmatpush1.bf16.msra.mxu0 %v940
    %1051 = vmatprep.subr.bf16.mxu0 %v943
    %1052 = vmatpush1.bf16.msra.mxu0 %v942
    %1053 = vmatprep.subr.bf16.mxu0 %v945
    %1054 = vmatpush1.bf16.msra.mxu0 %v944
    %1055 = vmatprep.subr.bf16.mxu0 %v947
    %1056 = vmatpush1.bf16.msra.mxu0 %v946
    %1057 = vmatprep.subr.bf16.mxu0 %v949
    %1058 = vmatpush1.bf16.msra.mxu0 %v948
    %1059 = vmatprep.subr.bf16.mxu0 %v951
    %1060 = vmatpush1.bf16.msra.mxu0 %v950
    %1061 = vmatprep.subr.bf16.mxu0 %v953
    %1062 = vmatpush1.bf16.msra.mxu0 %v952
    %1063 = vmatprep.mubr.bf16.mxu0 %v1030
    %1064 = vmatmul.mubr.bf16.gmra.mrb[0].mxu0 %v1029
    %v1065 = vpop.f32.mrb[0].mxu0
    %v1066 = vadd.f32 %v819, %v1065
    %v1067 = vpop.f32.mrb[0].mxu0
    %v1068 = vadd.f32 %v823, %v1067
    %v1069 = vpop.f32.mrb[0].mxu0
    %v1070 = vpop.f32.mrb[0].mxu0
    %1071 = vdwg.mxu0
    %v1072 = vmax.f32 %v1066, 0.0
    %v1073 = vmax.f32 %v1068, 0.0
    %v1074 = vpack.c.bf16 %v1072, %v1072
    %v1075 = vpack.c.bf16 %v1073, %v1073
    %1076 = vmatprep.subr.bf16.mxu0 %v923
    %1077 = vmatpush1.bf16.msra.mxu0 %v922
    %1078 = vmatprep.subr.bf16.mxu0 %v925
    %1079 = vmatpush1.bf16.msra.mxu0 %v924
    %1080 = vmatprep.subr.bf16.mxu0 %v927
    %1081 = vmatpush1.bf16.msra.mxu0 %v926
    %1082 = vmatprep.subr.bf16.mxu0 %v929
    %1083 = vmatpush1.bf16.msra.mxu0 %v928
    %1084 = vmatprep.subr.bf16.mxu0 %v931
    %1085 = vmatpush1.bf16.msra.mxu0 %v930
    %1086 = vmatprep.subr.bf16.mxu0 %v933
    %1087 = vmatpush1.bf16.msra.mxu0 %v932
    %1088 = vmatprep.subr.bf16.mxu0 %v935
    %1089 = vmatpush1.bf16.msra.mxu0 %v934
    %1090 = vmatprep.subr.bf16.mxu0 %v937
    %1091 = vmatpush1.bf16.msra.mxu0 %v936
    %1092 = vmatprep.subr.bf16.mxu0 %v939
    %1093 = vmatpush1.bf16.msra.mxu0 %v938
    %1094 = vmatprep.subr.bf16.mxu0 %v941
    %1095 = vmatpush1.bf16.msra.mxu0 %v940
    %1096 = vmatprep.subr.bf16.mxu0 %v943
    %1097 = vmatpush1.bf16.msra.mxu0 %v942
    %1098 = vmatprep.subr.bf16.mxu0 %v945
    %1099 = vmatpush1.bf16.msra.mxu0 %v944
    %1100 = vmatprep.subr.bf16.mxu0 %v947
    %1101 = vmatpush1.bf16.msra.mxu0 %v946
    %1102 = vmatprep.subr.bf16.mxu0 %v949
    %1103 = vmatpush1.bf16.msra.mxu0 %v948
    %1104 = vmatprep.subr.bf16.mxu0 %v951
    %1105 = vmatpush1.bf16.msra.mxu0 %v950
    %1106 = vmatprep.subr.bf16.mxu0 %v953
    %1107 = vmatpush1.bf16.msra.mxu0 %v952
    %1108 = vmatprep.mubr.bf16.mxu0 %v1075
    %1109 = vmatmul.mubr.bf16.gmra.mrb[0].mxu0 %v1074
    %v1110 = vpop.f32.mrb[0].mxu0
    %v1111 = vadd.f32 %v819, %v1110
    %v1112 = vpop.f32.mrb[0].mxu0
    %v1113 = vadd.f32 %v823, %v1112
    %v1114 = vpop.f32.mrb[0].mxu0
    %v1115 = vpop.f32.mrb[0].mxu0
    %1116 = vdwg.mxu0
    %v1117 = vmax.f32 %v1111, 0.0
    %v1118 = vmax.f32 %v1113, 0.0
    %v1119 = vpack.c.bf16 %v1117, %v1117
    %v1120 = vpack.c.bf16 %v1118, %v1118
    %1121 = vmatprep.subr.bf16.mxu0 %v923
    %1122 = vmatpush1.bf16.msra.mxu0 %v922
    %1123 = vmatprep.subr.bf16.mxu0 %v925
    %1124 = vmatpush1.bf16.msra.mxu0 %v924
    %1125 = vmatprep.subr.bf16.mxu0 %v927
    %1126 = vmatpush1.bf16.msra.mxu0 %v926
    %1127 = vmatprep.subr.bf16.mxu0 %v929
    %1128 = vmatpush1.bf16.msra.mxu0 %v928
    %1129 = vmatprep.subr.bf16.mxu0 %v931
    %1130 = vmatpush1.bf16.msra.mxu0 %v930
    %1131 = vmatprep.subr.bf16.mxu0 %v933
    %1132 = vmatpush1.bf16.msra.mxu0 %v932
    %1133 = vmatprep.subr.bf16.mxu0 %v935
    %1134 = vmatpush1.bf16.msra.mxu0 %v934
    %1135 = vmatprep.subr.bf16.mxu0 %v937
    %1136 = vmatpush1.bf16.msra.mxu0 %v936
    %1137 = vmatprep.subr.bf16.mxu0 %v939
    %1138 = vmatpush1.bf16.msra.mxu0 %v938
    %1139 = vmatprep.subr.bf16.mxu0 %v941
    %1140 = vmatpush1.bf16.msra.mxu0 %v940
    %1141 = vmatprep.subr.bf16.mxu0 %v943
    %1142 = vmatpush1.bf16.msra.mxu0 %v942
    %1143 = vmatprep.subr.bf16.mxu0 %v945
    %1144 = vmatpush1.bf16.msra.mxu0 %v944
    %1145 = vmatprep.subr.bf16.mxu0 %v947
    %1146 = vmatpush1.bf16.msra.mxu0 %v946
    %1147 = vmatprep.subr.bf16.mxu0 %v949
    %1148 = vmatpush1.bf16.msra.mxu0 %v948
    %1149 = vmatprep.subr.bf16.mxu0 %v951
    %1150 = vmatpush1.bf16.msra.mxu0 %v950
    %1151 = vmatprep.subr.bf16.mxu0 %v953
    %1152 = vmatpush1.bf16.msra.mxu0 %v952
    %1153 = vmatprep.mubr.bf16.mxu0 %v1120
    %1154 = vmatmul.mubr.bf16.gmra.mrb[0].mxu0 %v1119
    %v1155 = vpop.f32.mrb[0].mxu0
    %v1156 = vadd.f32 %v819, %v1155
    %v1157 = vpop.f32.mrb[0].mxu0
    %v1158 = vadd.f32 %v823, %v1157
    %v1159 = vpop.f32.mrb[0].mxu0
    %v1160 = vpop.f32.mrb[0].mxu0
    %1161 = vdwg.mxu0
    %v1162 = vmax.f32 %v1156, 0.0
    %v1163 = vmax.f32 %v1158, 0.0
    %v1164 = vpack.c.bf16 %v1162, %v1162
    %v1165 = vpack.c.bf16 %v1163, %v1163
    %1166 = vmatprep.subr.bf16.mxu0 %v923
    %1167 = vmatpush1.bf16.msra.mxu0 %v922
    %1168 = vmatprep.subr.bf16.mxu0 %v925
    %1169 = vmatpush1.bf16.msra.mxu0 %v924
    %1170 = vmatprep.subr.bf16.mxu0 %v927
    %1171 = vmatpush1.bf16.msra.mxu0 %v926
    %1172 = vmatprep.subr.bf16.mxu0 %v929
    %1173 = vmatpush1.bf16.msra.mxu0 %v928
    %1174 = vmatprep.subr.bf16.mxu0 %v931
    %1175 = vmatpush1.bf16.msra.mxu0 %v930
    %1176 = vmatprep.subr.bf16.mxu0 %v933
    %1177 = vmatpush1.bf16.msra.mxu0 %v932
    %1178 = vmatprep.subr.bf16.mxu0 %v935
    %1179 = vmatpush1.bf16.msra.mxu0 %v934
    %1180 = vmatprep.subr.bf16.mxu0 %v937
    %1181 = vmatpush1.bf16.msra.mxu0 %v936
    %1182 = vmatprep.subr.bf16.mxu0 %v939
    %1183 = vmatpush1.bf16.msra.mxu0 %v938
    %1184 = vmatprep.subr.bf16.mxu0 %v941
    %1185 = vmatpush1.bf16.msra.mxu0 %v940
    %1186 = vmatprep.subr.bf16.mxu0 %v943
    %1187 = vmatpush1.bf16.msra.mxu0 %v942
    %1188 = vmatprep.subr.bf16.mxu0 %v945
    %1189 = vmatpush1.bf16.msra.mxu0 %v944
    %1190 = vmatprep.subr.bf16.mxu0 %v947
    %1191 = vmatpush1.bf16.msra.mxu0 %v946
    %1192 = vmatprep.subr.bf16.mxu0 %v949
    %1193 = vmatpush1.bf16.msra.mxu0 %v948
    %1194 = vmatprep.subr.bf16.mxu0 %v951
    %1195 = vmatpush1.bf16.msra.mxu0 %v950
    %1196 = vmatprep.subr.bf16.mxu0 %v953
    %1197 = vmatpush1.bf16.msra.mxu0 %v952
    %1198 = vmatprep.mubr.bf16.mxu0 %v1165
    %1199 = vmatmul.mubr.bf16.gmra.mrb[0].mxu0 %v1164
    %v1200 = vpop.f32.mrb[0].mxu0
    %v1201 = vadd.f32 %v819, %v1200
    %v1202 = vpop.f32.mrb[0].mxu0
    %v1203 = vadd.f32 %v823, %v1202
    %v1204 = vpop.f32.mrb[0].mxu0
    %v1205 = vpop.f32.mrb[0].mxu0
    %1206 = vdwg.mxu0
    %v1207 = vmax.f32 %v1201, 0.0
    %v1208 = vmax.f32 %v1203, 0.0
    %v1209 = vpack.c.bf16 %v1207, %v1207
    %v1210 = vpack.c.bf16 %v1208, %v1208
    %v1211 = vld [vmem:[%s5] sm:$0xf]
    %v1212 = vld [vmem:[%s5 + $0x4] sm:$0xf]
    %v1213 = vld [vmem:[%s5 + $0x8] sm:$0xf]
    %v1214 = vld [vmem:[%s5 + $0xc] sm:$0xf]
    %v1215 = vld [vmem:[%s5 + $0x10] sm:$0xf]
    %v1216 = vld [vmem:[%s5 + $0x14] sm:$0xf]
    %v1217 = vld [vmem:[%s5 + $0x18] sm:$0xf]
    %v1218 = vld [vmem:[%s5 + $0x1c] sm:$0xf]
    %v1219 = vld [vmem:[%s5 + $0x20] sm:$0xf]
    %v1220 = vld [vmem:[%s5 + $0x24] sm:$0xf]
    %v1221 = vld [vmem:[%s5 + $0x28] sm:$0xf]
    %v1222 = vld [vmem:[%s5 + $0x2c] sm:$0xf]
    %v1223 = vld [vmem:[%s5 + $0x30] sm:$0xf]
    %v1224 = vld [vmem:[%s5 + $0x34] sm:$0xf]
    %v1225 = vld [vmem:[%s5 + $0x38] sm:$0xf]
    %v1226 = vld [vmem:[%s5 + $0x3c] sm:$0xf]
    %v1227 = vld [vmem:[%s5 + $0x40] sm:$0xf]
    %v1228 = vld [vmem:[%s5 + $0x44] sm:$0xf]
    %v1229 = vld [vmem:[%s5 + $0x48] sm:$0xf]
    %v1230 = vld [vmem:[%s5 + $0x4c] sm:$0xf]
    %v1231 = vld [vmem:[%s5 + $0x50] sm:$0xf]
    %v1232 = vld [vmem:[%s5 + $0x54] sm:$0xf]
    %v1233 = vld [vmem:[%s5 + $0x58] sm:$0xf]
    %v1234 = vld [vmem:[%s5 + $0x5c] sm:$0xf]
    %v1235 = vld [vmem:[%s5 + $0x60] sm:$0xf]
    %v1236 = vld [vmem:[%s5 + $0x64] sm:$0xf]
    %v1237 = vld [vmem:[%s5 + $0x68] sm:$0xf]
    %v1238 = vld [vmem:[%s5 + $0x6c] sm:$0xf]
    %v1239 = vld [vmem:[%s5 + $0x70] sm:$0xf]
    %v1240 = vld [vmem:[%s5 + $0x74] sm:$0xf]
    %v1241 = vld [vmem:[%s5 + $0x78] sm:$0xf]
    %v1242 = vld [vmem:[%s5 + $0x7c] sm:$0xf]
    %v1243 = vld [vmem:[%s6] sm:$0x1]
    %v1245 = vlaneseq
    %v1246 = vshrl.u32 %v1245, 7
    %v1247 = vsub.s32 0, %v1246
    %v1248 = vrot.slane %v1243, %v1247
    %v1282 = vunpack.c.l.b16 %v1211
    %v1283 = vunpack.c.l.b16 %v1212
    %v1284 = vunpack.c.l.b16 %v1213
    %v1285 = vunpack.c.l.b16 %v1214
    %v1286 = vunpack.c.l.b16 %v1215
    %v1287 = vunpack.c.l.b16 %v1216
    %v1288 = vunpack.c.l.b16 %v1217
    %v1289 = vunpack.c.l.b16 %v1218
    %v1290 = vunpack.c.l.b16 %v1219
    %v1291 = vunpack.c.l.b16 %v1220
    %v1292 = vunpack.c.l.b16 %v1221
    %v1293 = vunpack.c.l.b16 %v1222
    %v1294 = vunpack.c.l.b16 %v1223
    %v1295 = vunpack.c.l.b16 %v1224
    %v1296 = vunpack.c.l.b16 %v1225
    %v1297 = vunpack.c.l.b16 %v1226
    %v1298 = vunpack.c.l.b16 %v1227
    %v1299 = vunpack.c.l.b16 %v1228
    %v1300 = vunpack.c.l.b16 %v1229
    %v1301 = vunpack.c.l.b16 %v1230
    %v1302 = vunpack.c.l.b16 %v1231
    %v1303 = vunpack.c.l.b16 %v1232
    %v1304 = vunpack.c.l.b16 %v1233
    %v1305 = vunpack.c.l.b16 %v1234
    %v1306 = vunpack.c.l.b16 %v1235
    %v1307 = vunpack.c.l.b16 %v1236
    %v1308 = vunpack.c.l.b16 %v1237
    %v1309 = vunpack.c.l.b16 %v1238
    %v1310 = vunpack.c.l.b16 %v1239
    %v1311 = vunpack.c.l.b16 %v1240
    %v1312 = vunpack.c.l.b16 %v1241
    %v1313 = vunpack.c.l.b16 %v1242
    %v1314 = vpack.c.b16 %v1283, %v1282
    %v1315 = vpack.c.b16 %v1285, %v1284
    %v1316 = vpack.c.b16 %v1287, %v1286
    %v1317 = vpack.c.b16 %v1289, %v1288
    %v1318 = vpack.c.b16 %v1291, %v1290
    %v1319 = vpack.c.b16 %v1293, %v1292
    %v1320 = vpack.c.b16 %v1295, %v1294
    %v1321 = vpack.c.b16 %v1297, %v1296
    %v1322 = vpack.c.b16 %v1299, %v1298
    %v1323 = vpack.c.b16 %v1301, %v1300
    %v1324 = vpack.c.b16 %v1303, %v1302
    %v1325 = vpack.c.b16 %v1305, %v1304
    %v1326 = vpack.c.b16 %v1307, %v1306
    %v1327 = vpack.c.b16 %v1309, %v1308
    %v1328 = vpack.c.b16 %v1311, %v1310
    %v1329 = vpack.c.b16 %v1313, %v1312
    %1346 = vmatprep.subr.bf16.mxu0 0
    %1347 = vmatpush1.bf16.msra.mxu0 %v1314
    %1348 = vmatprep.subr.bf16.mxu0 0
    %1349 = vmatpush1.bf16.msra.mxu0 %v1315
    %1350 = vmatprep.subr.bf16.mxu0 0
    %1351 = vmatpush1.bf16.msra.mxu0 %v1316
    %1352 = vmatprep.subr.bf16.mxu0 0
    %1353 = vmatpush1.bf16.msra.mxu0 %v1317
    %1354 = vmatprep.subr.bf16.mxu0 0
    %1355 = vmatpush1.bf16.msra.mxu0 %v1318
    %1356 = vmatprep.subr.bf16.mxu0 0
    %1357 = vmatpush1.bf16.msra.mxu0 %v1319
    %1358 = vmatprep.subr.bf16.mxu0 0
    %1359 = vmatpush1.bf16.msra.mxu0 %v1320
    %1360 = vmatprep.subr.bf16.mxu0 0
    %1361 = vmatpush1.bf16.msra.mxu0 %v1321
    %1362 = vmatprep.subr.bf16.mxu0 0
    %1363 = vmatpush1.bf16.msra.mxu0 %v1322
    %1364 = vmatprep.subr.bf16.mxu0 0
    %1365 = vmatpush1.bf16.msra.mxu0 %v1323
    %1366 = vmatprep.subr.bf16.mxu0 0
    %1367 = vmatpush1.bf16.msra.mxu0 %v1324
    %1368 = vmatprep.subr.bf16.mxu0 0
    %1369 = vmatpush1.bf16.msra.mxu0 %v1325
    %1370 = vmatprep.subr.bf16.mxu0 0
    %1371 = vmatpush1.bf16.msra.mxu0 %v1326
    %1372 = vmatprep.subr.bf16.mxu0 0
    %1373 = vmatpush1.bf16.msra.mxu0 %v1327
    %1374 = vmatprep.subr.bf16.mxu0 0
    %1375 = vmatpush1.bf16.msra.mxu0 %v1328
    %1376 = vmatprep.subr.bf16.mxu0 0
    %1377 = vmatpush1.bf16.msra.mxu0 %v1329
    %1378 = vmatprep.mubr.bf16.mxu0 %v1210
    %1379 = vmatmul.mubr.bf16.gmra.mrb[0].mxu0 %v1209
    %v1380 = vpop.f32.mrb[0].mxu0
    %v1381 = vadd.f32 %v1248, %v1380
    %v1382 = vpop.f32.mrb[0].mxu0
    %v1383 = vpop.f32.mrb[0].mxu0
    %v1384 = vpop.f32.mrb[0].mxu0
    %1385 = vdwg.mxu0
    %1386 = vst [vmem:[%s7] sm:$0xff] %v1381
    // Predicated region
    $region38: #{simplenet_forward.1} parent=1 // pred_check
      _
    $region39: #{simplenet_forward.1} parent=1 // pred_check_branch
      %1388 = sbr.rel (0) target = $region41
    $region40: #{simplenet_forward.1} parent=1 // pred_region
      _
    $region41: #{simplenet_forward.1} parent=1 // pred_fallthru
      _
    // Predicated region
    $region42: #{simplenet_forward.1} parent=1 // pred_check
      _
    $region43: #{simplenet_forward.1} parent=1 // pred_check_branch
      %1390 = sbr.rel (0) target = $region45
    $region44: #{simplenet_forward.1} parent=1 // pred_region
      _
    $region45: #{simplenet_forward.1} parent=1 // pred_fallthru
      _
    %1391 = vsyncpa [#allocation3], 1
    %1392 = vsyncpa [#allocation5], 1

</llo_original>
